<compile_context>
chip_gen: v5e
topology: v5e:2x2
jax: 0.10.0
libtpu: 0.0.40
codegen_flags: <defaults>
</compile_context>

<pallas_src>
import functools

import jax
import jax.numpy as jnp
from jax import lax
from jax.experimental import pallas as pl
from jax.experimental.pallas import tpu as pltpu

NEG_SLOPE = 0.01   # F.leaky_relu default negative_slope
HIDDEN = 16
HEAD_PAD = 128     # lane-dense fused head width (>= output_nodes + 1)
TILE_B = 2048      # batch rows per grid step; ~1 MiB output block, fits all gens


def _round_up(n, m):
    return ((n + m - 1) // m) * m


def _leaky_relu(x):
    return jnp.where(x >= 0, x, NEG_SLOPE * x)


def actor_critic_kernel(
    x_ref,
    w1_ref, b1_ref,
    w2_ref, b2_ref,
    wh_ref, bh_ref,      # fused [action | value | pad] head, lane-dense width
    out_ref,             # (tile_b, HEAD_PAD): [prob | value | zeros]
    *, output_nodes,
):
    x = x_ref[...]

    # fc1 + leaky_relu
    h = jnp.dot(x, w1_ref[...], preferred_element_type=jnp.float32) + b1_ref[...]
    h = _leaky_relu(h)

    # fc2 + leaky_relu
    h = jnp.dot(h, w2_ref[...], preferred_element_type=jnp.float32) + b2_ref[...]
    h = _leaky_relu(h)

    # fused action + value heads: one MXU matmul, lane-dense result
    logits = jnp.dot(h, wh_ref[...], preferred_element_type=jnp.float32) + bh_ref[...]

    col = lax.broadcasted_iota(jnp.int32, logits.shape, dimension=1)
    action_mask = col < output_nodes

    # softmax over the action columns only (value / pad columns masked to -inf)
    masked = jnp.where(action_mask, logits, -jnp.inf)
    m = jnp.max(masked, axis=-1, keepdims=True)
    e = jnp.where(action_mask, jnp.exp(masked - m), 0.0)
    denom = jnp.sum(e, axis=-1, keepdims=True)
    prob = e * pl.reciprocal(denom, approx=True)   # EUP reciprocal, ~free slot

    # pack [prob | value | zeros] into one lane-dense output slab
    out = jnp.where(action_mask, prob,
                    jnp.where(col == output_nodes, logits, 0.0))
    out_ref[...] = out


@functools.partial(jax.jit, static_argnames=("output_nodes",))
def actor_critic_forward(x, params, output_nodes):
    """x: (B, input_nodes) float32. Returns (action_prob (B, out), state_value (B, 1))."""
    assert output_nodes + 1 <= HEAD_PAD
    b_orig, input_nodes = x.shape

    # Tile the batch; only pad when the batch isn't already a tile multiple.
    tile_b = min(TILE_B, _round_up(max(b_orig, 1), 8))
    b_pad = _round_up(b_orig, tile_b)
    if b_pad != b_orig:
        x = jnp.pad(x, ((0, b_pad - b_orig), (0, 0)))

    # Fuse action + value heads into one lane-dense (HIDDEN, HEAD_PAD) weight.
    wh = (
        jnp.zeros((HIDDEN, HEAD_PAD), jnp.float32)
        .at[:, :output_nodes].set(params["wa"])
        .at[:, output_nodes:output_nodes + 1].set(params["wv"])
    )
    bh = (
        jnp.zeros((1, HEAD_PAD), jnp.float32)
        .at[:, :output_nodes].set(params["ba"])
        .at[:, output_nodes:output_nodes + 1].set(params["bv"])
    )

    grid = (b_pad // tile_b,)

    def const_spec(shape):
        # Weights/biases: same block every grid step -> stay resident in VMEM.
        return pl.BlockSpec(shape, lambda i: (0, 0))

    out = pl.pallas_call(
        functools.partial(actor_critic_kernel, output_nodes=output_nodes),
        out_shape=jax.ShapeDtypeStruct((b_pad, HEAD_PAD), jnp.float32),
        grid=grid,
        in_specs=[
            pl.BlockSpec((tile_b, input_nodes), lambda i: (i, 0)),
            const_spec((input_nodes, HIDDEN)),
            const_spec((1, HIDDEN)),
            const_spec((HIDDEN, HIDDEN)),
            const_spec((1, HIDDEN)),
            const_spec((HIDDEN, HEAD_PAD)),
            const_spec((1, HEAD_PAD)),
        ],
        out_specs=pl.BlockSpec((tile_b, HEAD_PAD), lambda i: (i, 0)),
        compiler_params=pltpu.CompilerParams(
            dimension_semantics=("parallel",),   # shard batch tiles across TCs (v7x)
        ),
    )(
        x,
        params["w1"], params["b1"],
        params["w2"], params["b2"],
        wh, bh,
    )

    prob = out[:b_orig, :output_nodes]
    value = out[:b_orig, output_nodes:output_nodes + 1]
    return prob, value


def init_params(key, input_nodes, output_nodes):
    """Deterministic init mimicking nn.Linear default (uniform +/- 1/sqrt(fan_in)).

    Weights are stored transposed relative to PyTorch: (in_features, out_features).
    Biases are stored as (1, out_features).
    """
    def linear(k, fan_in, fan_out):
        kw, kb = jax.random.split(k)
        bound = 1.0 / jnp.sqrt(float(fan_in))
        w = jax.random.uniform(kw, (fan_in, fan_out), jnp.float32, -bound, bound)
        b = jax.random.uniform(kb, (1, fan_out), jnp.float32, -bound, bound)
        return w, b

    k1, k2, k3, k4 = jax.random.split(key, 4)
    w1, b1 = linear(k1, input_nodes, HIDDEN)
    w2, b2 = linear(k2, HIDDEN, HIDDEN)
    wa, ba = linear(k3, HIDDEN, output_nodes)
    wv, bv = linear(k4, HIDDEN, 1)
    return dict(w1=w1, b1=b1, w2=w2, b2=b2, wa=wa, ba=ba, wv=wv, bv=bv)


def reference_forward(x, params):
    h = _leaky_relu(x @ params["w1"] + params["b1"])
    h = _leaky_relu(h @ params["w2"] + params["b2"])
    logits = h @ params["wa"] + params["ba"]
    prob = jax.nn.softmax(logits, axis=-1)
    value = h @ params["wv"] + params["bv"]
    return prob, value


# TODO(synk): select_action (Categorical sampling) and update (returns/loss/optimizer)
# are host-side RL training utilities, not part of the forward pass; not ported.

if __name__ == "__main__":
    key = jax.random.PRNGKey(0)
    k_param, k_x = jax.random.split(key)

    batch = 2
    input_nodes = 8
    output_nodes = 4

    params = init_params(k_param, input_nodes, output_nodes)
    x = jax.random.normal(k_x, (batch, input_nodes), jnp.float32)

    prob, value = actor_critic_forward(x, params, output_nodes)
    prob = jax.block_until_ready(prob)
    value = jax.block_until_ready(value)

    # Sanity check against a pure-JAX reference of the same math.
    # (prob tolerance is slightly relaxed because the softmax denominator uses
    #  the hardware approximate reciprocal.)
    prob_ref, value_ref = reference_forward(x, params)
    assert prob.shape == (batch, output_nodes)
    assert value.shape == (batch, 1)
    assert jnp.allclose(prob, prob_ref, atol=5e-3, rtol=5e-3)
    assert jnp.allclose(value, value_ref, atol=1e-4, rtol=1e-4)
    assert jnp.allclose(jnp.sum(prob, axis=-1), 1.0, atol=5e-3)

    print("KERNEL_OK")
</pallas_src>

<mosaic_0001>
module attributes {stable_mosaic.version = 11 : i64} {
  func.func @actor_critic_kernel(%arg0: i32, %arg1: memref<8x8xf32, #tpu.memory_space<vmem>>, %arg2: memref<8x16xf32, #tpu.memory_space<vmem>>, %arg3: memref<1x16xf32, #tpu.memory_space<vmem>>, %arg4: memref<16x16xf32, #tpu.memory_space<vmem>>, %arg5: memref<1x16xf32, #tpu.memory_space<vmem>>, %arg6: memref<16x128xf32, #tpu.memory_space<vmem>>, %arg7: memref<1x128xf32, #tpu.memory_space<vmem>>, %arg8: memref<8x128xf32, #tpu.memory_space<vmem>>) attributes {dimension_semantics = [#tpu.dimension_semantics<parallel>], iteration_bounds = array<i64: 1>, scalar_prefetch = 0 : i64, scratch_operands = 0 : i64, tpu.core_type = #tpu.core_type<tc>, window_params = [{transform_indices = @transform_0, window_bounds = array<i64: 8, 8>}, {pipeline_mode = #tpu.pipeline_mode<synchronous>, transform_indices = @transform_1, window_bounds = array<i64: 8, 16>}, {pipeline_mode = #tpu.pipeline_mode<synchronous>, transform_indices = @transform_2, window_bounds = array<i64: 1, 16>}, {pipeline_mode = #tpu.pipeline_mode<synchronous>, transform_indices = @transform_3, window_bounds = array<i64: 16, 16>}, {pipeline_mode = #tpu.pipeline_mode<synchronous>, transform_indices = @transform_4, window_bounds = array<i64: 1, 16>}, {pipeline_mode = #tpu.pipeline_mode<synchronous>, transform_indices = @transform_5, window_bounds = array<i64: 16, 128>}, {pipeline_mode = #tpu.pipeline_mode<synchronous>, transform_indices = @transform_6, window_bounds = array<i64: 1, 128>}, {transform_indices = @transform_7, window_bounds = array<i64: 8, 128>}]} {
    %c0 = arith.constant 0 : index
    %c0_0 = arith.constant 0 : index
    %0 = vector.load %arg1[%c0, %c0_0] : memref<8x8xf32, #tpu.memory_space<vmem>>, vector<8x8xf32>
    %c0_1 = arith.constant 0 : index
    %c0_2 = arith.constant 0 : index
    %1 = vector.load %arg2[%c0_1, %c0_2] : memref<8x16xf32, #tpu.memory_space<vmem>>, vector<8x16xf32>
    %cst = arith.constant dense<0.000000e+00> : vector<8x16xf32>
    %2 = tpu.matmul %0, %1, %cst {dimension_numbers = #tpu.dot_dimension_numbers<[1], [0], [0], [1], [0, 0, 1, 1], [], []>} : vector<8x8xf32>, vector<8x16xf32>, vector<8x16xf32> -> vector<8x16xf32>
    %c0_3 = arith.constant 0 : index
    %c0_4 = arith.constant 0 : index
    %3 = vector.load %arg3[%c0_3, %c0_4] : memref<1x16xf32, #tpu.memory_space<vmem>>, vector<1x16xf32>
    %4 = vector.broadcast %3 : vector<1x16xf32> to vector<8x16xf32>
    %5 = arith.addf %2, %4 : vector<8x16xf32>
    %cst_5 = arith.constant 0.000000e+00 : f32
    %6 = vector.broadcast %cst_5 : f32 to vector<8x16xf32>
    %7 = arith.cmpf oge, %5, %6 : vector<8x16xf32>
    %cst_6 = arith.constant 0.00999999977 : f32
    %8 = vector.broadcast %cst_6 : f32 to vector<8x16xf32>
    %9 = arith.mulf %8, %5 : vector<8x16xf32>
    %10 = arith.select %7, %5, %9 : vector<8x16xi1>, vector<8x16xf32>
    %c0_7 = arith.constant 0 : index
    %c0_8 = arith.constant 0 : index
    %11 = vector.load %arg4[%c0_7, %c0_8] : memref<16x16xf32, #tpu.memory_space<vmem>>, vector<16x16xf32>
    %cst_9 = arith.constant dense<0.000000e+00> : vector<8x16xf32>
    %12 = tpu.matmul %10, %11, %cst_9 {dimension_numbers = #tpu.dot_dimension_numbers<[1], [0], [0], [1], [0, 0, 1, 1], [], []>} : vector<8x16xf32>, vector<16x16xf32>, vector<8x16xf32> -> vector<8x16xf32>
    %c0_10 = arith.constant 0 : index
    %c0_11 = arith.constant 0 : index
    %13 = vector.load %arg5[%c0_10, %c0_11] : memref<1x16xf32, #tpu.memory_space<vmem>>, vector<1x16xf32>
    %14 = vector.broadcast %13 : vector<1x16xf32> to vector<8x16xf32>
    %15 = arith.addf %12, %14 : vector<8x16xf32>
    %cst_12 = arith.constant 0.000000e+00 : f32
    %16 = vector.broadcast %cst_12 : f32 to vector<8x16xf32>
    %17 = arith.cmpf oge, %15, %16 : vector<8x16xf32>
    %cst_13 = arith.constant 0.00999999977 : f32
    %18 = vector.broadcast %cst_13 : f32 to vector<8x16xf32>
    %19 = arith.mulf %18, %15 : vector<8x16xf32>
    %20 = arith.select %17, %15, %19 : vector<8x16xi1>, vector<8x16xf32>
    %c0_14 = arith.constant 0 : index
    %c0_15 = arith.constant 0 : index
    %21 = vector.load %arg6[%c0_14, %c0_15] : memref<16x128xf32, #tpu.memory_space<vmem>>, vector<16x128xf32>
    %cst_16 = arith.constant dense<0.000000e+00> : vector<8x128xf32>
    %22 = tpu.matmul %20, %21, %cst_16 {dimension_numbers = #tpu.dot_dimension_numbers<[1], [0], [0], [1], [0, 0, 1, 1], [], []>} : vector<8x16xf32>, vector<16x128xf32>, vector<8x128xf32> -> vector<8x128xf32>
    %c0_17 = arith.constant 0 : index
    %c0_18 = arith.constant 0 : index
    %23 = vector.load %arg7[%c0_17, %c0_18] : memref<1x128xf32, #tpu.memory_space<vmem>>, vector<1x128xf32>
    %24 = vector.broadcast %23 : vector<1x128xf32> to vector<8x128xf32>
    %25 = arith.addf %22, %24 : vector<8x128xf32>
    %26 = tpu.iota {dimensions = array<i32: 1>} : vector<8x128xi32>
    %c4_i32 = arith.constant 4 : i32
    %27 = vector.broadcast %c4_i32 : i32 to vector<8x128xi32>
    %28 = arith.cmpi slt, %26, %27 : vector<8x128xi32>
    %cst_19 = arith.constant 0xFF800000 : f32
    %29 = vector.broadcast %cst_19 : f32 to vector<8x128xf32>
    %30 = arith.select %28, %25, %29 : vector<8x128xi1>, vector<8x128xf32>
    %cst_20 = arith.constant dense<0xFF800000> : vector<8xf32>
    %31 = vector.multi_reduction <maximumf>, %30, %cst_20 [1] : vector<8x128xf32> to vector<8xf32>
    %32 = vector.shape_cast %31 : vector<8xf32> to vector<8x1xf32>
    %33 = vector.broadcast %32 : vector<8x1xf32> to vector<8x128xf32>
    %34 = arith.subf %30, %33 : vector<8x128xf32>
    %35 = math.exp %34 : vector<8x128xf32>
    %cst_21 = arith.constant 0.000000e+00 : f32
    %36 = vector.broadcast %cst_21 : f32 to vector<8x128xf32>
    %37 = arith.select %28, %35, %36 : vector<8x128xi1>, vector<8x128xf32>
    %cst_22 = arith.constant dense<0.000000e+00> : vector<8xf32>
    %38 = vector.multi_reduction <add>, %37, %cst_22 [1] : vector<8x128xf32> to vector<8xf32>
    %39 = vector.shape_cast %38 : vector<8xf32> to vector<8x1xf32>
    %40 = tpu.reciprocal %39 {approx = true} : vector<8x1xf32> -> vector<8x1xf32>
    %41 = vector.broadcast %40 : vector<8x1xf32> to vector<8x128xf32>
    %42 = arith.mulf %37, %41 : vector<8x128xf32>
    %c4_i32_23 = arith.constant 4 : i32
    %43 = vector.broadcast %c4_i32_23 : i32 to vector<8x128xi32>
    %44 = arith.cmpi eq, %26, %43 : vector<8x128xi32>
    %cst_24 = arith.constant 0.000000e+00 : f32
    %45 = vector.broadcast %cst_24 : f32 to vector<8x128xf32>
    %46 = arith.select %44, %25, %45 : vector<8x128xi1>, vector<8x128xf32>
    %47 = arith.select %28, %42, %46 : vector<8x128xi1>, vector<8x128xf32>
    %c0_25 = arith.constant 0 : index
    %c0_26 = arith.constant 0 : index
    %48 = vector.load %arg8[%c0_25, %c0_26] : memref<8x128xf32, #tpu.memory_space<vmem>>, vector<8x128xf32>
    tpu.vector_store %arg8[%c0_25, %c0_26], %47 {strides = array<i32>} : memref<8x128xf32, #tpu.memory_space<vmem>>, vector<8x128xf32>,
    return
  }
  func.func @transform_0(%arg0: i32) -> (i32, i32) {
    %c0_i32 = arith.constant 0 : i32
    %c0_i32_0 = arith.constant 0 : i32
    return %arg0, %c0_i32 : i32, i32
  }
  func.func @transform_1(%arg0: i32) -> (i32, i32) {
    %c0_i32 = arith.constant 0 : i32
    %c0_i32_0 = arith.constant 0 : i32
    %c0_i32_1 = arith.constant 0 : i32
    return %c0_i32, %c0_i32_0 : i32, i32
  }
  func.func @transform_2(%arg0: i32) -> (i32, i32) {
    %c0_i32 = arith.constant 0 : i32
    %c0_i32_0 = arith.constant 0 : i32
    %c0_i32_1 = arith.constant 0 : i32
    return %c0_i32, %c0_i32_0 : i32, i32
  }
  func.func @transform_3(%arg0: i32) -> (i32, i32) {
    %c0_i32 = arith.constant 0 : i32
    %c0_i32_0 = arith.constant 0 : i32
    %c0_i32_1 = arith.constant 0 : i32
    return %c0_i32, %c0_i32_0 : i32, i32
  }
  func.func @transform_4(%arg0: i32) -> (i32, i32) {
    %c0_i32 = arith.constant 0 : i32
    %c0_i32_0 = arith.constant 0 : i32
    %c0_i32_1 = arith.constant 0 : i32
    return %c0_i32, %c0_i32_0 : i32, i32
  }
  func.func @transform_5(%arg0: i32) -> (i32, i32) {
    %c0_i32 = arith.constant 0 : i32
    %c0_i32_0 = arith.constant 0 : i32
    %c0_i32_1 = arith.constant 0 : i32
    return %c0_i32, %c0_i32_0 : i32, i32
  }
  func.func @transform_6(%arg0: i32) -> (i32, i32) {
    %c0_i32 = arith.constant 0 : i32
    %c0_i32_0 = arith.constant 0 : i32
    %c0_i32_1 = arith.constant 0 : i32
    return %c0_i32, %c0_i32_0 : i32, i32
  }
  func.func @transform_7(%arg0: i32) -> (i32, i32) {
    %c0_i32 = arith.constant 0 : i32
    %c0_i32_0 = arith.constant 0 : i32
    return %arg0, %c0_i32 : i32, i32
  }
}

</mosaic_0001>

<llo_original>
// kernel: actor_critic_forward.1
$region0: #{actor_critic_forward.1}
  #allocation0 [shape = 'u32[]', space=smem, size = 0x4, offset = 0x4, fixed_abs, tag = 'smem constant byte address 0x4 - core index']
  #allocation1 [shape = 'u32[72,128]{1,0:T(1,128)}', space=vmem, size = 0x9000, scoped, tag = 'internal scratch']
  %s0 = inlined_call_operand.vmem [shape: f32[8,8], index: 0, kind: input, shape index: {}]
  %s1 = inlined_call_operand.vmem [shape: f32[8,16], index: 1, kind: input, shape index: {}]
  %s2 = inlined_call_operand.vmem [shape: f32[1,16], index: 2, kind: input, shape index: {}]
  %s3 = inlined_call_operand.vmem [shape: f32[16,16], index: 3, kind: input, shape index: {}]
  %s4 = inlined_call_operand.vmem [shape: f32[1,16], index: 4, kind: input, shape index: {}]
  %s5 = inlined_call_operand.vmem [shape: f32[16,128], index: 5, kind: input, shape index: {}]
  %s6 = inlined_call_operand.vmem [shape: f32[1,128], index: 6, kind: input, shape index: {}]
  %s7 = inlined_call_operand.vmem [shape: f32[8,128], index: 7, kind: output, shape index: {}]
  %s8 = sld [smem:[#allocation0]]
  $region38: #{actor_critic_forward.1} parent=0
    _
  %s10 = ssub.s32 1, %s8
  %s11 = scalar_select 0, %s10, %s8
  // Predicated region
  $region2: #{actor_critic_forward.1} parent=0 // pred_check
    _
  $region3: #{actor_critic_forward.1} parent=0 // pred_check_branch
    %13 = sbr.rel (0) target = $region5
  $region4: #{actor_critic_forward.1} parent=0 // pred_region
    _
  $region5: #{actor_critic_forward.1} parent=0 // pred_fallthru
    _
  // Predicated region
  $region6: #{actor_critic_forward.1} parent=0 // pred_check
    _
  $region7: #{actor_critic_forward.1} parent=0 // pred_check_branch
    %15 = sbr.rel (0) target = $region9
  $region8: #{actor_critic_forward.1} parent=0 // pred_region
    _
  $region9: #{actor_critic_forward.1} parent=0 // pred_fallthru
    _
  // Predicated region
  $region10: #{actor_critic_forward.1} parent=0 // pred_check
    _
  $region11: #{actor_critic_forward.1} parent=0 // pred_check_branch
    %17 = sbr.rel (0) target = $region13
  $region12: #{actor_critic_forward.1} parent=0 // pred_region
    _
  $region13: #{actor_critic_forward.1} parent=0 // pred_fallthru
    _
  // Predicated region
  $region14: #{actor_critic_forward.1} parent=0 // pred_check
    _
  $region15: #{actor_critic_forward.1} parent=0 // pred_check_branch
    %19 = sbr.rel (0) target = $region17
  $region16: #{actor_critic_forward.1} parent=0 // pred_region
    _
  $region17: #{actor_critic_forward.1} parent=0 // pred_fallthru
    _
  // Predicated region
  $region18: #{actor_critic_forward.1} parent=0 // pred_check
    _
  $region19: #{actor_critic_forward.1} parent=0 // pred_check_branch
    %21 = sbr.rel (0) target = $region21
  $region20: #{actor_critic_forward.1} parent=0 // pred_region
    _
  $region21: #{actor_critic_forward.1} parent=0 // pred_fallthru
    _
  // Predicated region
  $region22: #{actor_critic_forward.1} parent=0 // pred_check
    _
  $region23: #{actor_critic_forward.1} parent=0 // pred_check_branch
    %23 = sbr.rel (0) target = $region25
  $region24: #{actor_critic_forward.1} parent=0 // pred_region
    _
  $region25: #{actor_critic_forward.1} parent=0 // pred_fallthru
    _
  // Predicated region
  $region26: #{actor_critic_forward.1} parent=0 // pred_check
    _
  $region27: #{actor_critic_forward.1} parent=0 // pred_check_branch
    %25 = sbr.rel (0) target = $region29
  $region28: #{actor_critic_forward.1} parent=0 // pred_region
    _
  $region29: #{actor_critic_forward.1} parent=0 // pred_fallthru
    _
  %v26 = vld [vmem:[%s0] sm:$0xff]
  %v27 = vld [vmem:[%s1] sm:$0xff]
  %v28 = vld [vmem:[%s2] sm:$0x1]
  %v30 = vperm.slane %v28, 0
  %vm32 = vcmask 64512
  %v34 = vsel %vm32, %v26, 0
  %36 = vmatpush.msra.mxu0 0.0
  %37 = vmatpush.msra.mxu0 0.0
  %38 = vmatpush.msra.mxu0 0.0
  %39 = vmatpush.msra.mxu0 0.0
  %40 = vmatpush.msra.mxu0 0.0
  %41 = vmatpush.msra.mxu0 0.0
  %42 = vmatpush.msra.mxu0 0.0
  %43 = vmatpush.msra.mxu0 0.0
  %44 = vmatpush.msra.mxu0 0.0
  %45 = vmatpush.msra.mxu0 0.0
  %46 = vmatpush.msra.mxu0 0.0
  %47 = vmatpush.msra.mxu0 0.0
  %48 = vmatpush.msra.mxu0 0.0
  %49 = vmatpush.msra.mxu0 0.0
  %50 = vmatpush.msra.mxu0 0.0
  %51 = vmatpush.msra.mxu0 %v27
  %52 = vmatmul.f32.gmra.mxu0 %v34
  %v53 = vpop.f32.mrf.mxu0
  %v54 = vadd.f32 %v30, %v53
  %55 = vdwg.mxu0
  %vm56 = vcmp.ge.f32.partialorder %v54, 0.0
  %v57 = vmul.f32 %v54, 0.01
  %v58 = vsel %vm56, %v54, %v57
  %v59 = vld [vmem:[%s3] sm:$0xff]
  %v60 = vld [vmem:[%s3 + $0x8] sm:$0xff]
  %v61 = vld [vmem:[%s4] sm:$0x1]
  %v63 = vperm.slane %v61, 0
  %vm65 = vcmask 130048
  %v67 = vsel %vm65, %v58, 0
  %69 = vmatpush.msra.mxu0 0.0
  %70 = vmatpush.msra.mxu0 0.0
  %71 = vmatpush.msra.mxu0 0.0
  %72 = vmatpush.msra.mxu0 0.0
  %73 = vmatpush.msra.mxu0 0.0
  %74 = vmatpush.msra.mxu0 0.0
  %75 = vmatpush.msra.mxu0 0.0
  %76 = vmatpush.msra.mxu0 0.0
  %77 = vmatpush.msra.mxu0 0.0
  %78 = vmatpush.msra.mxu0 0.0
  %79 = vmatpush.msra.mxu0 0.0
  %80 = vmatpush.msra.mxu0 0.0
  %81 = vmatpush.msra.mxu0 0.0
  %82 = vmatpush.msra.mxu0 0.0
  %83 = vmatpush.msra.mxu0 %v60
  %84 = vmatpush.msra.mxu0 %v59
  %85 = vmatmul.f32.gmra.mxu0 %v67
  %v86 = vpop.f32.mrf.mxu0
  %v87 = vadd.f32 %v63, %v86
  %88 = vdwg.mxu0
  %vm89 = vcmp.ge.f32.partialorder %v87, 0.0
  %v90 = vmul.f32 %v87, 0.01
  %v91 = vsel %vm89, %v87, %v90
  %v92 = vld [vmem:[%s5] sm:$0xff]
  %v93 = vld [vmem:[%s5 + $0x8] sm:$0xff]
  %v94 = vld [vmem:[%s6] sm:$0x1]
  %v96 = vperm.slane %v94, 0
  %v99 = vsel %vm65, %v91, 0
  %101 = vmatpush.msra.mxu0 0.0
  %102 = vmatpush.msra.mxu0 0.0
  %103 = vmatpush.msra.mxu0 0.0
  %104 = vmatpush.msra.mxu0 0.0
  %105 = vmatpush.msra.mxu0 0.0
  %106 = vmatpush.msra.mxu0 0.0
  %107 = vmatpush.msra.mxu0 0.0
  %108 = vmatpush.msra.mxu0 0.0
  %109 = vmatpush.msra.mxu0 0.0
  %110 = vmatpush.msra.mxu0 0.0
  %111 = vmatpush.msra.mxu0 0.0
  %112 = vmatpush.msra.mxu0 0.0
  %113 = vmatpush.msra.mxu0 0.0
  %114 = vmatpush.msra.mxu0 0.0
  %115 = vmatpush.msra.mxu0 %v93
  %116 = vmatpush.msra.mxu0 %v92
  %117 = vmatmul.f32.gmra.mxu0 %v99
  %v118 = vpop.f32.mrf.mxu0
  %v119 = vadd.f32 %v96, %v118
  %120 = vdwg.mxu0
  %v121 = vlaneseq
  %v122 = vand.u32 %v121, 127
  %vm123 = vcmp.lt.s32.totalorder %v122, 4
  %v124 = vsel %vm123, %v119, -inf
  %125 = vmax.xlane.f32.xlu0 %v124
  %v126 = vpop.xlane.xlu0 %125
  %v127 = vsub.f32 %v124, %v126
  %v128 = vmul.f32 %v127, 1.442695
  %v129 = vpow.pop %v128
  %v130 = vsel %vm123, %v129, 0.0
  %131 = vadd.xlane.f32.xlu0 %v130
  %v132 = vpop.xlane.xlu0 %131
  %v133 = vrcp.pop %v132
  %v134 = vmul.f32 %v130, %v133
  %vm135 = vcmp.eq.s32.totalorder %v122, 4
  %v136 = vsel %vm135, %v119, 0.0
  %v137 = vsel %vm123, %v134, %v136
  %138 = vst [vmem:[%s7] sm:$0xff] %v137
  // Predicated region
  $region30: #{actor_critic_forward.1} parent=0 // pred_check
    _
  $region31: #{actor_critic_forward.1} parent=0 // pred_check_branch
    %140 = sbr.rel (0) target = $region33
  $region32: #{actor_critic_forward.1} parent=0 // pred_region
    _
  $region33: #{actor_critic_forward.1} parent=0 // pred_fallthru
    _
  // Predicated region
  $region34: #{actor_critic_forward.1} parent=0 // pred_check
    _
  $region35: #{actor_critic_forward.1} parent=0 // pred_check_branch
    %142 = sbr.rel (0) target = $region37
  $region36: #{actor_critic_forward.1} parent=0 // pred_region
    _
  $region37: #{actor_critic_forward.1} parent=0 // pred_fallthru
    _

</llo_original>
